<compile_context>
chip_gen: v6e
topology: v6e:2x2x1
jax: 0.10.0
libtpu: 0.0.40
codegen_flags: <defaults>
</compile_context>

<pallas_src>
import functools
import math

import jax
import jax.numpy as jnp
from jax.experimental import pallas as pl
from jax.experimental.pallas import tpu as pltpu


def _round_up(x, m):
    return ((x + m - 1) // m) * m


def _vmem_capacity_bytes():
    """Physical VMEM per TensorCore (v7x: 64 MiB, v5e/v6e: 128 MiB); safe fallback."""
    try:
        info = pltpu.get_tpu_info()
        cap = int(getattr(info, "vmem_capacity_bytes", 0))
        if cap > 0:
            return cap
    except Exception:
        pass
    return 64 * 1024 * 1024  # conservative (v7x-sized)


def _choose_tn(d_model, vocab, budget_bytes, *, wbytes, out_bytes=4, tm_hint=512):
    """Largest multiple-of-128 vocab tile whose working set fits the VMEM budget."""
    vocab_128 = _round_up(max(vocab, 1), 128)
    tn = min(2048, vocab_128)

    def est(tn_):
        return (2 * d_model * d_model * wbytes       # resident dense weight (dbl-buffered)
                + 2 * d_model * tn_ * wbytes         # decoder weight tile
                + 2 * tm_hint * tn_ * out_bytes      # output tile
                + 2 * tm_hint * d_model * wbytes     # x tile
                + tm_hint * d_model * 2              # bf16 h scratch
                + 8 * (d_model + tn_) * 4)           # small vectors

    while tn > 128 and est(tn) > budget_bytes:
        tn -= 128
    return max(tn, 128)


# ---------------------------------------------------------------------------
# Fused kernel: dense + SiLU + LayerNorm (once per row tile) -> vocab matmul + bias
# ---------------------------------------------------------------------------
def _lm_head_kernel(x_ref, wd_ref, bd_ref, g_ref, beta_ref, wv_ref, bias_ref,
                    o_ref, h_ref, *, eps):
    # Compute the transformed hidden states once per row tile (vocab axis is inner
    # and "arbitrary", so j == 0 runs before any other vocab tile of this row tile).
    @pl.when(pl.program_id(1) == 0)
    def _():
        # bf16 x bf16 MXU matmul, f32 accumulation; no in-kernel operand casts.
        y = jnp.dot(x_ref[...], wd_ref[...], preferred_element_type=jnp.float32)
        y = y + bd_ref[...]
        # SiLU (f32 elementwise; EUP handles the sigmoid).
        y = y * jax.nn.sigmoid(y)
        # LayerNorm over the lane axis (biased variance, like torch).
        mean = jnp.mean(y, axis=-1, keepdims=True)
        c = y - mean
        var = jnp.mean(c * c, axis=-1, keepdims=True)
        y = c * jax.lax.rsqrt(var + eps)
        y = y * g_ref[...] + beta_ref[...]
        h_ref[...] = y.astype(h_ref.dtype)

    # Vocab projection for this (row tile, vocab tile): full-K matmul, bias fused.
    logits = jnp.dot(h_ref[...], wv_ref[...], preferred_element_type=jnp.float32)
    o_ref[...] = (logits + bias_ref[...]).astype(o_ref.dtype)


def lm_prediction_head_fused(x2d, w_dense_t, b_dense, ln_w, ln_b, w_dec_t, bias_row,
                             *, eps, tn, out_dtype, vmem_limit_bytes, tm=None):
    """x2d: (rows, d_model) in compute dtype; w_dense_t: (d_model, d_model) (in, out);
    w_dec_t: (d_model, vocab_p) pre-padded so vocab_p % tn == 0; bias_row: (1, vocab_p)."""
    rows, d_model = x2d.shape
    d_model2, vocab_p = w_dec_t.shape
    assert d_model2 == d_model and vocab_p % tn == 0

    if tm is None:
        # Don't inflate the row tile past the actual row count (decode regime).
        tm = min(512, _round_up(rows, 8))
    rows_p = _round_up(rows, tm)
    if rows_p != rows:
        # Cheap activation pad; padded zero rows flow to output=beta and are sliced off.
        x2d = jnp.pad(x2d, ((0, rows_p - rows), (0, 0)))

    grid = (rows_p // tm, vocab_p // tn)

    # TODO(synk): for very large d_model (>~3k) the resident dense weight should be
    # K-tiled (extra grid axis + f32 acc) or single-buffered to stay inside v7x VMEM.
    out = pl.pallas_call(
        functools.partial(_lm_head_kernel, eps=eps),
        out_shape=jax.ShapeDtypeStruct((rows_p, vocab_p), out_dtype),
        grid_spec=pltpu.PrefetchScalarGridSpec(
            num_scalar_prefetch=0,
            grid=grid,
            in_specs=[
                pl.BlockSpec((tm, d_model), lambda i, j: (i, 0)),        # x row tile
                pl.BlockSpec((d_model, d_model), lambda i, j: (0, 0)),   # dense weight
                pl.BlockSpec((1, d_model), lambda i, j: (0, 0)),         # dense bias
                pl.BlockSpec((1, d_model), lambda i, j: (0, 0)),         # ln gamma
                pl.BlockSpec((1, d_model), lambda i, j: (0, 0)),         # ln beta
                pl.BlockSpec((d_model, tn), lambda i, j: (0, j)),        # decoder weight tile
                pl.BlockSpec((1, tn), lambda i, j: (0, j)),              # decoder bias tile
            ],
            out_specs=pl.BlockSpec((tm, tn), lambda i, j: (i, j)),
            scratch_shapes=[pltpu.VMEM((tm, d_model), w_dec_t.dtype)],   # bf16 h scratch
        ),
        compiler_params=pltpu.CompilerParams(
            # Vocab axis carries the h-scratch dependency -> must be "arbitrary".
            dimension_semantics=("parallel", "arbitrary"),
            vmem_limit_bytes=int(vmem_limit_bytes),
        ),
    )(x2d, w_dense_t, b_dense, ln_w, ln_b, w_dec_t, bias_row)

    return out[:rows] if rows_p != rows else out


# ---------------------------------------------------------------------------
# Module wrapper mirroring the PyTorch LMPredictionHead
# ---------------------------------------------------------------------------
class LMPredictionHead:
    def __init__(self, d_model, vocab_size, eps=1e-5,
                 compute_dtype=jnp.bfloat16, key=None):
        if key is None:
            key = jax.random.PRNGKey(0)
        k1, k2 = jax.random.split(key)
        scale = 1.0 / math.sqrt(d_model)

        self.d_model = d_model
        self.vocab_size = vocab_size
        self.eps = eps
        self.compute_dtype = compute_dtype

        # torch nn.Linear stores (out, in); pre-transpose ONCE to (in, out) and keep
        # the big matmul weights in the native MXU dtype (bf16).
        w_dense = jax.random.uniform(k1, (d_model, d_model), jnp.float32, -scale, scale)
        self.w_dense_t = jnp.transpose(w_dense).astype(compute_dtype)
        # Small per-lane params stay f32 (exact, negligible footprint).
        self.b_dense = jnp.zeros((1, d_model), jnp.float32)
        self.ln_weight = jnp.ones((1, d_model), jnp.float32)
        self.ln_bias = jnp.zeros((1, d_model), jnp.float32)

        # Tile budget per hardware generation (v7x 64 MiB vs v5e/v6e 128 MiB VMEM).
        cap = _vmem_capacity_bytes()
        self._vmem_limit = int(cap * 0.85)
        budget = int(cap * 0.70)
        wbytes = jnp.dtype(compute_dtype).itemsize
        self.tn = _choose_tn(d_model, vocab_size, budget, wbytes=wbytes)

        # Pre-transpose + pre-pad the vocab projection ONCE (no per-call copies).
        vocab_p = _round_up(vocab_size, self.tn)
        w_dec = jax.random.uniform(k2, (vocab_size, d_model), jnp.float32, -scale, scale)
        w_dec_t = jnp.transpose(w_dec)                      # (d_model, vocab)
        if vocab_p != vocab_size:
            w_dec_t = jnp.pad(w_dec_t, ((0, 0), (0, vocab_p - vocab_size)))
        self.w_dec_t = w_dec_t.astype(compute_dtype)
        self.vocab_p = vocab_p

        # decoder.bias is tied to self.bias (zeros) in the torch module.
        self.bias = jnp.zeros((vocab_size,), jnp.float32)
        bias_row = self.bias.reshape(1, vocab_size)
        if vocab_p != vocab_size:
            bias_row = jnp.pad(bias_row, ((0, 0), (0, vocab_p - vocab_size)))
        self.bias_row = bias_row

    def __call__(self, hidden_states):
        orig_shape = hidden_states.shape
        d_model = orig_shape[-1]
        rows = math.prod(orig_shape[:-1])
        # Cast only the (small) activation to the compute dtype; weights already are.
        x2d = hidden_states.reshape(rows, d_model).astype(self.compute_dtype)

        logits = lm_prediction_head_fused(
            x2d, self.w_dense_t, self.b_dense, self.ln_weight, self.ln_bias,
            self.w_dec_t, self.bias_row,
            eps=self.eps, tn=self.tn, out_dtype=hidden_states.dtype,
            vmem_limit_bytes=self._vmem_limit)

        if logits.shape[1] != self.vocab_size:
            logits = logits[:, :self.vocab_size]
        return logits.reshape(*orig_shape[:-1], self.vocab_size)


def _reference_forward(x, head):
    xf = x.astype(jnp.float32)
    wd = head.w_dense_t.astype(jnp.float32)                      # (in, out)
    y = xf @ wd + head.b_dense
    y = y * jax.nn.sigmoid(y)
    mean = jnp.mean(y, axis=-1, keepdims=True)
    var = jnp.mean((y - mean) ** 2, axis=-1, keepdims=True)
    y = (y - mean) * jax.lax.rsqrt(var + head.eps)
    y = y * head.ln_weight + head.ln_bias
    wv = head.w_dec_t[:, :head.vocab_size].astype(jnp.float32)   # (in, vocab)
    logits = y @ wv + head.bias
    return logits.astype(x.dtype)


if __name__ == "__main__":
    # Small shapes consistent with the module; d_model / vocab are multiples of 128
    # so every store is a full-width (unmasked) vst.
    batch, seq, d_model, vocab = 2, 8, 128, 384

    key = jax.random.PRNGKey(0)
    k_x, k_p = jax.random.split(key)
    x = jax.random.normal(k_x, (batch, seq, d_model), dtype=jnp.float32)

    head = LMPredictionHead(d_model, vocab, eps=1e-5, key=k_p)

    out = jax.block_until_ready(head(x))
    ref = _reference_forward(x, head)

    assert out.shape == (batch, seq, vocab), out.shape
    assert out.dtype == x.dtype, out.dtype
    err = float(jnp.max(jnp.abs(out.astype(jnp.float32) - ref.astype(jnp.float32))))
    assert jnp.allclose(out.astype(jnp.float32), ref.astype(jnp.float32),
                        atol=5e-2, rtol=5e-2), err

    print("KERNEL_OK")
</pallas_src>

<mosaic_0001>
module attributes {stable_mosaic.version = 11 : i64} {
  func.func @_lm_head_kernel(%arg0: i32, %arg1: i32, %arg2: memref<16x128xbf16, #tpu.memory_space<vmem>>, %arg3: memref<128x128xbf16, #tpu.memory_space<vmem>>, %arg4: memref<1x128xf32, #tpu.memory_space<vmem>>, %arg5: memref<1x128xf32, #tpu.memory_space<vmem>>, %arg6: memref<1x128xf32, #tpu.memory_space<vmem>>, %arg7: memref<128x384xbf16, #tpu.memory_space<vmem>>, %arg8: memref<1x384xf32, #tpu.memory_space<vmem>>, %arg9: memref<16x384xf32, #tpu.memory_space<vmem>>, %arg10: memref<16x128xbf16, #tpu.memory_space<vmem>>) attributes {dimension_semantics = [#tpu.dimension_semantics<parallel>, #tpu.dimension_semantics<arbitrary>], iteration_bounds = array<i64: 1, 1>, scalar_prefetch = 0 : i64, scratch_operands = 1 : i64, tpu.core_type = #tpu.core_type<tc>, window_params = [{transform_indices = @transform_0, window_bounds = array<i64: 16, 128>}, {pipeline_mode = #tpu.pipeline_mode<synchronous>, transform_indices = @transform_1, window_bounds = array<i64: 128, 128>}, {pipeline_mode = #tpu.pipeline_mode<synchronous>, transform_indices = @transform_2, window_bounds = array<i64: 1, 128>}, {pipeline_mode = #tpu.pipeline_mode<synchronous>, transform_indices = @transform_3, window_bounds = array<i64: 1, 128>}, {pipeline_mode = #tpu.pipeline_mode<synchronous>, transform_indices = @transform_4, window_bounds = array<i64: 1, 128>}, {transform_indices = @transform_5, window_bounds = array<i64: 128, 384>}, {transform_indices = @transform_6, window_bounds = array<i64: 1, 384>}, {transform_indices = @transform_7, window_bounds = array<i64: 16, 384>}]} {
    %c0_i32 = arith.constant 0 : i32
    %0 = arith.cmpi eq, %arg1, %c0_i32 : i32
    %1 = arith.extui %0 : i1 to i32
    %c0_i32_0 = arith.constant 0 : i32
    %2 = arith.cmpi ne, %1, %c0_i32_0 : i32
    scf.if %2 {
      %c0_8 = arith.constant 0 : index
      %c0_9 = arith.constant 0 : index
      %10 = vector.load %arg2[%c0_8, %c0_9] : memref<16x128xbf16, #tpu.memory_space<vmem>>, vector<16x128xbf16>
      %c0_10 = arith.constant 0 : index
      %c0_11 = arith.constant 0 : index
      %11 = vector.load %arg3[%c0_10, %c0_11] : memref<128x128xbf16, #tpu.memory_space<vmem>>, vector<128x128xbf16>
      %cst_12 = arith.constant dense<0.000000e+00> : vector<16x128xf32>
      %12 = tpu.matmul %10, %11, %cst_12 {dimension_numbers = #tpu.dot_dimension_numbers<[1], [0], [0], [1], [0, 0, 1, 1], [], []>} : vector<16x128xbf16>, vector<128x128xbf16>, vector<16x128xf32> -> vector<16x128xf32>
      %c0_13 = arith.constant 0 : index
      %c0_14 = arith.constant 0 : index
      %13 = vector.load %arg4[%c0_13, %c0_14] : memref<1x128xf32, #tpu.memory_space<vmem>>, vector<1x128xf32>
      %14 = vector.broadcast %13 : vector<1x128xf32> to vector<16x128xf32>
      %15 = arith.addf %12, %14 : vector<16x128xf32>
      %16 = arith.negf %15 : vector<16x128xf32>
      %17 = math.exp %16 : vector<16x128xf32>
      %cst_15 = arith.constant 1.000000e+00 : f32
      %18 = vector.broadcast %cst_15 : f32 to vector<16x128xf32>
      %19 = arith.addf %18, %17 : vector<16x128xf32>
      %20 = arith.divf %18, %19 : vector<16x128xf32>
      %21 = arith.mulf %15, %20 : vector<16x128xf32>
      %cst_16 = arith.constant dense<0.000000e+00> : vector<16xf32>
      %22 = vector.multi_reduction <add>, %21, %cst_16 [1] : vector<16x128xf32> to vector<16xf32>
      %23 = vector.shape_cast %22 : vector<16xf32> to vector<16x1xf32>
      %cst_17 = arith.constant 1.280000e+02 : f32
      %24 = vector.broadcast %cst_17 : f32 to vector<16x1xf32>
      %25 = arith.divf %23, %24 : vector<16x1xf32>
      %26 = vector.broadcast %25 : vector<16x1xf32> to vector<16x128xf32>
      %27 = arith.subf %21, %26 : vector<16x128xf32>
      %28 = arith.mulf %27, %27 : vector<16x128xf32>
      %cst_18 = arith.constant dense<0.000000e+00> : vector<16xf32>
      %29 = vector.multi_reduction <add>, %28, %cst_18 [1] : vector<16x128xf32> to vector<16xf32>
      %30 = vector.shape_cast %29 : vector<16xf32> to vector<16x1xf32>
      %cst_19 = arith.constant 1.280000e+02 : f32
      %31 = vector.broadcast %cst_19 : f32 to vector<16x1xf32>
      %32 = arith.divf %30, %31 : vector<16x1xf32>
      %cst_20 = arith.constant 9.99999974E-6 : f32
      %33 = vector.broadcast %cst_20 : f32 to vector<16x1xf32>
      %34 = arith.addf %32, %33 : vector<16x1xf32>
      %35 = math.rsqrt %34 : vector<16x1xf32>
      %36 = vector.broadcast %35 : vector<16x1xf32> to vector<16x128xf32>
      %37 = arith.mulf %27, %36 : vector<16x128xf32>
      %c0_21 = arith.constant 0 : index
      %c0_22 = arith.constant 0 : index
      %38 = vector.load %arg5[%c0_21, %c0_22] : memref<1x128xf32, #tpu.memory_space<vmem>>, vector<1x128xf32>
      %39 = vector.broadcast %38 : vector<1x128xf32> to vector<16x128xf32>
      %40 = arith.mulf %37, %39 : vector<16x128xf32>
      %c0_23 = arith.constant 0 : index
      %c0_24 = arith.constant 0 : index
      %41 = vector.load %arg6[%c0_23, %c0_24] : memref<1x128xf32, #tpu.memory_space<vmem>>, vector<1x128xf32>
      %42 = vector.broadcast %41 : vector<1x128xf32> to vector<16x128xf32>
      %43 = arith.addf %40, %42 : vector<16x128xf32>
      %44 = arith.truncf %43 : vector<16x128xf32> to vector<16x128xbf16>
      %c0_25 = arith.constant 0 : index
      %c0_26 = arith.constant 0 : index
      %45 = vector.load %arg10[%c0_25, %c0_26] : memref<16x128xbf16, #tpu.memory_space<vmem>>, vector<16x128xbf16>
      tpu.vector_store %arg10[%c0_25, %c0_26], %44 {strides = array<i32>} : memref<16x128xbf16, #tpu.memory_space<vmem>>, vector<16x128xbf16>,
    } else {
    }
    %c0 = arith.constant 0 : index
    %c0_1 = arith.constant 0 : index
    %3 = vector.load %arg10[%c0, %c0_1] : memref<16x128xbf16, #tpu.memory_space<vmem>>, vector<16x128xbf16>
    %c0_2 = arith.constant 0 : index
    %c0_3 = arith.constant 0 : index
    %4 = vector.load %arg7[%c0_2, %c0_3] : memref<128x384xbf16, #tpu.memory_space<vmem>>, vector<128x384xbf16>
    %cst = arith.constant dense<0.000000e+00> : vector<16x384xf32>
    %5 = tpu.matmul %3, %4, %cst {dimension_numbers = #tpu.dot_dimension_numbers<[1], [0], [0], [1], [0, 0, 1, 1], [], []>} : vector<16x128xbf16>, vector<128x384xbf16>, vector<16x384xf32> -> vector<16x384xf32>
    %c0_4 = arith.constant 0 : index
    %c0_5 = arith.constant 0 : index
    %6 = vector.load %arg8[%c0_4, %c0_5] : memref<1x384xf32, #tpu.memory_space<vmem>>, vector<1x384xf32>
    %7 = vector.broadcast %6 : vector<1x384xf32> to vector<16x384xf32>
    %8 = arith.addf %5, %7 : vector<16x384xf32>
    %c0_6 = arith.constant 0 : index
    %c0_7 = arith.constant 0 : index
    %9 = vector.load %arg9[%c0_6, %c0_7] : memref<16x384xf32, #tpu.memory_space<vmem>>, vector<16x384xf32>
    tpu.vector_store %arg9[%c0_6, %c0_7], %8 {strides = array<i32>} : memref<16x384xf32, #tpu.memory_space<vmem>>, vector<16x384xf32>,
    return
  }
  func.func @transform_0(%arg0: i32, %arg1: i32) -> (i32, i32) {
    %c0_i32 = arith.constant 0 : i32
    %c0_i32_0 = arith.constant 0 : i32
    return %arg0, %c0_i32 : i32, i32
  }
  func.func @transform_1(%arg0: i32, %arg1: i32) -> (i32, i32) {
    %c0_i32 = arith.constant 0 : i32
    %c0_i32_0 = arith.constant 0 : i32
    %c0_i32_1 = arith.constant 0 : i32
    return %c0_i32, %c0_i32_0 : i32, i32
  }
  func.func @transform_2(%arg0: i32, %arg1: i32) -> (i32, i32) {
    %c0_i32 = arith.constant 0 : i32
    %c0_i32_0 = arith.constant 0 : i32
    %c0_i32_1 = arith.constant 0 : i32
    return %c0_i32, %c0_i32_0 : i32, i32
  }
  func.func @transform_3(%arg0: i32, %arg1: i32) -> (i32, i32) {
    %c0_i32 = arith.constant 0 : i32
    %c0_i32_0 = arith.constant 0 : i32
    %c0_i32_1 = arith.constant 0 : i32
    return %c0_i32, %c0_i32_0 : i32, i32
  }
  func.func @transform_4(%arg0: i32, %arg1: i32) -> (i32, i32) {
    %c0_i32 = arith.constant 0 : i32
    %c0_i32_0 = arith.constant 0 : i32
    %c0_i32_1 = arith.constant 0 : i32
    return %c0_i32, %c0_i32_0 : i32, i32
  }
  func.func @transform_5(%arg0: i32, %arg1: i32) -> (i32, i32) {
    %c0_i32 = arith.constant 0 : i32
    %c0_i32_0 = arith.constant 0 : i32
    return %c0_i32, %arg1 : i32, i32
  }
  func.func @transform_6(%arg0: i32, %arg1: i32) -> (i32, i32) {
    %c0_i32 = arith.constant 0 : i32
    %c0_i32_0 = arith.constant 0 : i32
    return %c0_i32, %arg1 : i32, i32
  }
  func.func @transform_7(%arg0: i32, %arg1: i32) -> (i32, i32) {
    %c0_i32 = arith.constant 0 : i32
    return %arg0, %arg1 : i32, i32
  }
}

</mosaic_0001>

<llo_original>
// kernel: tpu_custom_call.1
$region0: #{tpu_custom_call.1}
  #allocation0 [shape = 'u32[]', space=smem, size = 0x4, offset = 0x4, fixed_abs, tag = 'smem constant byte address 0x4 - core index']
  #allocation1 [shape = 'u32[144,128]{1,0:T(1,128)}', space=vmem, size = 0x12000, scoped, tag = 'internal scratch']
  #allocation2 [shape = 'bf16[16,128]{1,0:T(8,128)(2,1)}', space=vmem, size = 0x1000, scoped, tag = 'scratch operand']
  %s0 = inlined_call_operand.hbm [shape: bf16[16,128], index: 0, kind: input, shape index: {}]
  %s1 = inlined_call_operand.hbm [shape: bf16[128,128], index: 1, kind: input, shape index: {}]
  %s2 = inlined_call_operand.vmem [shape: f32[1,128], index: 2, kind: input, shape index: {}]
  %s3 = inlined_call_operand.vmem [shape: f32[1,128], index: 3, kind: input, shape index: {}]
  %s4 = inlined_call_operand.vmem [shape: f32[1,128], index: 4, kind: input, shape index: {}]
  %s5 = inlined_call_operand.hbm [shape: bf16[128,384], index: 5, kind: input, shape index: {}]
  %s6 = inlined_call_operand.vmem [shape: f32[1,384], index: 6, kind: input, shape index: {}]
  %s7 = inlined_call_operand.hbm [shape: f32[16,384], index: 7, kind: output, shape index: {}]
  %s8 = sld [smem:[#allocation0]]
  $region54: #{tpu_custom_call.1} parent=0
    _
  %s10 = ssub.s32 1, %s8
  %s11 = scalar_select 0, %s10, %s8
  $region1: #{tpu_custom_call.1} parent=0
    #allocation3 [shape = 'u8[4096]{0}', space=vmem, size = 0x1000, scoped, tag = 'input window, operand 0, single buffered']
    #allocation4 [shape = 's32[1]{0}', space=sflag, size = 0x4, scoped, tag = 'scoped memory for tpu_custom_call.1']
    #allocation5 [shape = 's32[1]{0}', space=sflag, size = 0x4, scoped, tag = 'scoped memory for tpu_custom_call.1']
    #allocation6 [shape = 'u8[32768]{0}', space=vmem, size = 0x8000, scoped, tag = 'input window, operand 1, single buffered']
    #allocation7 [shape = 's32[1]{0}', space=sflag, size = 0x4, scoped, tag = 'scoped memory for tpu_custom_call.1']
    #allocation8 [shape = 'u8[98304]{0}', space=vmem, size = 0x18000, scoped, tag = 'input window, operand 5, single buffered']
    #allocation9 [shape = 'u8[24576]{0}', space=vmem, size = 0x6000, scoped, tag = 'output window, operand 0, single buffered']
    %12 = vsyncpa [#allocation4], 0
    %13 = vsyncpa [#allocation7], 0
    %14 = vsyncpa [#allocation5], 0
    // Predicated region
    $region2: #{tpu_custom_call.1} parent=1 // pred_check
      _
    $region3: #{tpu_custom_call.1} parent=1 // pred_check_branch
      %16 = sbr.rel (0) target = $region5
    $region4: #{tpu_custom_call.1} parent=1 // pred_region
      %s18 = ssub.s32 128, 128
      %19 = vsyncadd [#allocation4], %s18
      %s20 = sshll.u32 [#allocation3], 4
      %s21 = int_to_ptr.vmem [resolvable:$true] %s20
      %26 = dma.hbm_to_vmem [thread:$0]  %s0, 128, %s21, [#allocation4], 64, 64, 4
    $region5: #{tpu_custom_call.1} parent=1 // pred_fallthru
      _
    // Predicated region
    $region6: #{tpu_custom_call.1} parent=1 // pred_check
      _
    $region7: #{tpu_custom_call.1} parent=1 // pred_check_branch
      %28 = sbr.rel (0) target = $region9
    $region8: #{tpu_custom_call.1} parent=1 // pred_region
      %s30 = ssub.s32 1024, 1024
      %31 = vsyncadd [#allocation7], %s30
      %s32 = sshll.u32 [#allocation6], 4
      %s33 = int_to_ptr.vmem [resolvable:$true] %s32
      %38 = dma.hbm_to_vmem [thread:$0]  %s1, 1024, %s33, [#allocation7], 64, 64, 4
    $region9: #{tpu_custom_call.1} parent=1 // pred_fallthru
      _
    // Predicated region
    $region10: #{tpu_custom_call.1} parent=1 // pred_check
      _
    $region11: #{tpu_custom_call.1} parent=1 // pred_check_branch
      %40 = sbr.rel (0) target = $region13
    $region12: #{tpu_custom_call.1} parent=1 // pred_region
      _
    $region13: #{tpu_custom_call.1} parent=1 // pred_fallthru
      _
    // Predicated region
    $region14: #{tpu_custom_call.1} parent=1 // pred_check
      _
    $region15: #{tpu_custom_call.1} parent=1 // pred_check_branch
      %42 = sbr.rel (0) target = $region17
    $region16: #{tpu_custom_call.1} parent=1 // pred_region
      _
    $region17: #{tpu_custom_call.1} parent=1 // pred_fallthru
      _
    // Predicated region
    $region18: #{tpu_custom_call.1} parent=1 // pred_check
      _
    $region19: #{tpu_custom_call.1} parent=1 // pred_check_branch
      %44 = sbr.rel (0) target = $region21
    $region20: #{tpu_custom_call.1} parent=1 // pred_region
      _
    $region21: #{tpu_custom_call.1} parent=1 // pred_fallthru
      _
    // Predicated region
    $region22: #{tpu_custom_call.1} parent=1 // pred_check
      _
    $region23: #{tpu_custom_call.1} parent=1 // pred_check_branch
      %46 = sbr.rel (0) target = $region25
    $region24: #{tpu_custom_call.1} parent=1 // pred_region
      %s48 = ssub.s32 3072, 3072
      %49 = vsyncadd [#allocation7], %s48
      %s50 = sshll.u32 [#allocation8], 4
      %s51 = int_to_ptr.vmem [resolvable:$true] %s50
      %56 = dma.hbm_to_vmem [thread:$0]  %s5, 3072, %s51, [#allocation7], 192, 192, 12
    $region25: #{tpu_custom_call.1} parent=1 // pred_fallthru
      _
    // Predicated region
    $region26: #{tpu_custom_call.1} parent=1 // pred_check
      _
    $region27: #{tpu_custom_call.1} parent=1 // pred_check_branch
      %58 = sbr.rel (0) target = $region29
    $region28: #{tpu_custom_call.1} parent=1 // pred_region
      _
    $region29: #{tpu_custom_call.1} parent=1 // pred_fallthru
      _
    // Predicated region
    $region30: #{tpu_custom_call.1} parent=1 // pred_check
      _
    $region31: #{tpu_custom_call.1} parent=1 // pred_check_branch
      %60 = sbr.rel (0) target = $region33
    $region32: #{tpu_custom_call.1} parent=1 // pred_region
      %61 = dma.done [#allocation4], 128
    $region33: #{tpu_custom_call.1} parent=1 // pred_fallthru
      _
    // Predicated region
    $region34: #{tpu_custom_call.1} parent=1 // pred_check
      _
    $region35: #{tpu_custom_call.1} parent=1 // pred_check_branch
      %63 = sbr.rel (0) target = $region37
    $region36: #{tpu_custom_call.1} parent=1 // pred_region
      %64 = dma.done [#allocation7], 1024
    $region37: #{tpu_custom_call.1} parent=1 // pred_fallthru
      _
    // Predicated region
    $region38: #{tpu_custom_call.1} parent=1 // pred_check
      _
    $region39: #{tpu_custom_call.1} parent=1 // pred_check_branch
      %66 = sbr.rel (0) target = $region41
    $region40: #{tpu_custom_call.1} parent=1 // pred_region
      %67 = dma.done [#allocation7], 3072
    $region41: #{tpu_custom_call.1} parent=1 // pred_fallthru
      _
    %p69 = scmp.eq.s32.totalorder 0, 0
    // Predicated region
    $region42: #{tpu_custom_call.1} parent=1 // pred_check
      %p70 = pneg %p69
    $region43: #{tpu_custom_call.1} parent=1 // pred_check_branch
      %72 = sbr.rel (%p70) target = $region45
    $region44: #{tpu_custom_call.1} parent=1 // pred_region
      %v73 = vld [vmem:[#allocation3] sm:$0xf]
      %v74 = vld [vmem:[#allocation3 + $0x4] sm:$0xf]
      %v75 = vld [vmem:[#allocation6] sm:$0xf]
      %v76 = vld [vmem:[#allocation6 + $0x4] sm:$0xf]
      %v77 = vld [vmem:[#allocation6 + $0x8] sm:$0xf]
      %v78 = vld [vmem:[#allocation6 + $0xc] sm:$0xf]
      %v79 = vld [vmem:[#allocation6 + $0x10] sm:$0xf]
      %v80 = vld [vmem:[#allocation6 + $0x14] sm:$0xf]
      %v81 = vld [vmem:[#allocation6 + $0x18] sm:$0xf]
      %v82 = vld [vmem:[#allocation6 + $0x1c] sm:$0xf]
      %v83 = vld [vmem:[#allocation6 + $0x20] sm:$0xf]
      %v84 = vld [vmem:[#allocation6 + $0x24] sm:$0xf]
      %v85 = vld [vmem:[#allocation6 + $0x28] sm:$0xf]
      %v86 = vld [vmem:[#allocation6 + $0x2c] sm:$0xf]
      %v87 = vld [vmem:[#allocation6 + $0x30] sm:$0xf]
      %v88 = vld [vmem:[#allocation6 + $0x34] sm:$0xf]
      %v89 = vld [vmem:[#allocation6 + $0x38] sm:$0xf]
      %v90 = vld [vmem:[#allocation6 + $0x3c] sm:$0xf]
      %v91 = vld [vmem:[%s2] sm:$0x1]
      %v93 = vlaneseq
      %v94 = vshrl.u32 %v93, 7
      %v95 = vsub.s32 0, %v94
      %v96 = vrot.slane %v91, %v95
      %v100 = vunpack.c.l.b16 %v73
      %v101 = vunpack.c.l.b16 %v74
      %v102 = vpack.c.b16 %v101, %v100
      %v120 = vunpack.c.l.b16 %v75
      %v121 = vunpack.c.l.b16 %v76
      %v122 = vunpack.c.l.b16 %v77
      %v123 = vunpack.c.l.b16 %v78
      %v124 = vunpack.c.l.b16 %v79
      %v125 = vunpack.c.l.b16 %v80
      %v126 = vunpack.c.l.b16 %v81
      %v127 = vunpack.c.l.b16 %v82
      %v128 = vunpack.c.l.b16 %v83
      %v129 = vunpack.c.l.b16 %v84
      %v130 = vunpack.c.l.b16 %v85
      %v131 = vunpack.c.l.b16 %v86
      %v132 = vunpack.c.l.b16 %v87
      %v133 = vunpack.c.l.b16 %v88
      %v134 = vunpack.c.l.b16 %v89
      %v135 = vunpack.c.l.b16 %v90
      %v136 = vpack.c.b16 %v121, %v120
      %v137 = vpack.c.b16 %v123, %v122
      %v138 = vpack.c.b16 %v125, %v124
      %v139 = vpack.c.b16 %v127, %v126
      %v140 = vpack.c.b16 %v129, %v128
      %v141 = vpack.c.b16 %v131, %v130
      %v142 = vpack.c.b16 %v133, %v132
      %v143 = vpack.c.b16 %v135, %v134
      %152 = vmatprep.subr.bf16.mxu0 0
      %153 = vmatpush1.bf16.msra.mxu0 %v143
      %154 = vmatprep.subr.bf16.mxu0 0
      %155 = vmatpush1.bf16.msra.mxu0 %v142
      %156 = vmatprep.subr.bf16.mxu0 0
      %157 = vmatpush1.bf16.msra.mxu0 %v141
      %158 = vmatprep.subr.bf16.mxu0 0
      %159 = vmatpush1.bf16.msra.mxu0 %v140
      %160 = vmatprep.subr.bf16.mxu0 0
      %161 = vmatpush1.bf16.msra.mxu0 %v139
      %162 = vmatprep.subr.bf16.mxu0 0
      %163 = vmatpush1.bf16.msra.mxu0 %v138
      %164 = vmatprep.subr.bf16.mxu0 0
      %165 = vmatpush1.bf16.msra.mxu0 %v137
      %166 = vmatprep.subr.bf16.mxu0 0
      %167 = vmatpush1.bf16.msra.mxu0 %v136
      %168 = vmatprep.subr.bf16.mxu0 0
      %169 = vmatpush2.bf16.msra.mxu0 0
      %170 = vmatprep.subr.bf16.mxu0 0
      %171 = vmatpush2.bf16.msra.mxu0 0
      %172 = vmatprep.subr.bf16.mxu0 0
      %173 = vmatpush2.bf16.msra.mxu0 0
      %174 = vmatprep.subr.bf16.mxu0 0
      %175 = vmatpush2.bf16.msra.mxu0 0
      %176 = vmatprep.subr.bf16.mxu0 0
      %177 = vmatpush2.bf16.msra.mxu0 0
      %178 = vmatprep.subr.bf16.mxu0 0
      %179 = vmatpush2.bf16.msra.mxu0 0
      %180 = vmatprep.subr.bf16.mxu0 0
      %181 = vmatpush2.bf16.msra.mxu0 0
      %182 = vmatprep.subr.bf16.mxu0 0
      %183 = vmatpush2.bf16.msra.mxu0 0
      %184 = vmatprep.mubr.bf16.mxu0 0
      %185 = vmatmul.mubr.bf16.gmra.mxu0 %v102
      %v186 = vpop.f32.mrf.mxu0
      %v187 = vadd.f32 %v96, %v186
      %v188 = vpop.f32.mrf.mxu0
      %v189 = vpop.f32.mrf.mxu0
      %v190 = vadd.f32 %v96, %v189
      %v191 = vpop.f32.mrf.mxu0
      %192 = vdwg.mxu0
      %v193 = vxor.u32 %v187, 2147483648
      %v194 = vxor.u32 %v190, 2147483648
      %v195 = vmul.f32 %v193, 1.442695
      %v196 = vpow.pop %v195
      %v197 = vmul.f32 %v194, 1.442695
      %v198 = vpow.pop %v197
      %v199 = vadd.f32 %v196, 1.0
      %v200 = vadd.f32 %v198, 1.0
      %v201 = vrcp.pop %v199
      %v202 = vmul.f32 1.0, %v201
      %v203 = vrcp.pop %v200
      %v204 = vmul.f32 1.0, %v203
      %v205 = vmul.f32 %v187, %v202
      %v206 = vmul.f32 %v190, %v204
      %207 = vadd.xlane.f32.xlu0 %v205
      %v208 = vpop.xlane.xlu0 %207
      %209 = vadd.xlane.f32.xlu0 %v206
      %v210 = vpop.xlane.xlu0 %209
      %v211 = vrcp.pop 128.0
      %v212 = vmul.f32 %v208, %v211
      %v213 = vmul.f32 %v210, %v211
      %v214 = vsub.f32 %v205, %v212
      %v215 = vsub.f32 %v206, %v213
      %v216 = vmul.f32 %v214, %v214
      %v217 = vmul.f32 %v215, %v215
      %218 = vadd.xlane.f32.xlu0 %v216
      %v219 = vpop.xlane.xlu0 %218
      %220 = vadd.xlane.f32.xlu0 %v217
      %v221 = vpop.xlane.xlu0 %220
      %v222 = vmul.f32 %v219, %v211
      %v223 = vmul.f32 %v221, %v211
      %v224 = vadd.f32 %v222, 1e-05
      %v225 = vadd.f32 %v223, 1e-05
      %v226 = vrsqrt.pop %v224
      %v227 = vrsqrt.pop %v225
      %v228 = vmul.f32 %v214, %v226
      %v229 = vmul.f32 %v215, %v227
      %v230 = vld [vmem:[%s3] sm:$0x1]
      %v232 = vlaneseq
      %v233 = vshrl.u32 %v232, 7
      %v234 = vsub.s32 0, %v233
      %v235 = vrot.slane %v230, %v234
      %v237 = vmul.f32 %v228, %v235
      %v238 = vmul.f32 %v229, %v235
      %v239 = vld [vmem:[%s4] sm:$0x1]
      %v241 = vlaneseq
      %v242 = vshrl.u32 %v241, 7
      %v243 = vsub.s32 0, %v242
      %v244 = vrot.slane %v239, %v243
      %v246 = vadd.f32 %v237, %v244
      %v247 = vadd.f32 %v238, %v244
      %v248 = vpack.c.bf16 %v247, %v246
      %v250 = vunpack.c.l.b16 %v248
      %v251 = vunpack.c.h.b16 %v248
      %v252 = vpack.c.b16 %v250, %v250
      %v253 = vpack.c.b16 %v251, %v251
      %256 = vst [vmem:[#allocation2] sm:$0xf] %v252
      %257 = vst [vmem:[#allocation2 + $0x4] sm:$0xf] %v253
    $region45: #{tpu_custom_call.1} parent=1 // pred_fallthru
      _
    %v258 = vld [vmem:[#allocation2] sm:$0xf]
    %v259 = vld [vmem:[#allocation2 + $0x4] sm:$0xf]
    %v260 = vld [vmem:[#allocation8] sm:$0xff]
    %v261 = vld [vmem:[#allocation8 + $0x8] sm:$0xf]
    %v262 = vld [vmem:[#allocation8 + $0xc] sm:$0xff]
    %v263 = vld [vmem:[#allocation8 + $0x14] sm:$0xf]
    %v264 = vld [vmem:[#allocation8 + $0x18] sm:$0xff]
    %v265 = vld [vmem:[#allocation8 + $0x20] sm:$0xf]
    %v266 = vld [vmem:[#allocation8 + $0x24] sm:$0xff]
    %v267 = vld [vmem:[#allocation8 + $0x2c] sm:$0xf]
    %v268 = vld [vmem:[#allocation8 + $0x30] sm:$0xff]
    %v269 = vld [vmem:[#allocation8 + $0x38] sm:$0xf]
    %v270 = vld [vmem:[#allocation8 + $0x3c] sm:$0xff]
    %v271 = vld [vmem:[#allocation8 + $0x44] sm:$0xf]
    %v272 = vld [vmem:[#allocation8 + $0x48] sm:$0xff]
    %v273 = vld [vmem:[#allocation8 + $0x50] sm:$0xf]
    %v274 = vld [vmem:[#allocation8 + $0x54] sm:$0xff]
    %v275 = vld [vmem:[#allocation8 + $0x5c] sm:$0xf]
    %v276 = vld [vmem:[#allocation8 + $0x60] sm:$0xff]
    %v277 = vld [vmem:[#allocation8 + $0x68] sm:$0xf]
    %v278 = vld [vmem:[#allocation8 + $0x6c] sm:$0xff]
    %v279 = vld [vmem:[#allocation8 + $0x74] sm:$0xf]
    %v280 = vld [vmem:[#allocation8 + $0x78] sm:$0xff]
    %v281 = vld [vmem:[#allocation8 + $0x80] sm:$0xf]
    %v282 = vld [vmem:[#allocation8 + $0x84] sm:$0xff]
    %v283 = vld [vmem:[#allocation8 + $0x8c] sm:$0xf]
    %v284 = vld [vmem:[#allocation8 + $0x90] sm:$0xff]
    %v285 = vld [vmem:[#allocation8 + $0x98] sm:$0xf]
    %v286 = vld [vmem:[#allocation8 + $0x9c] sm:$0xff]
    %v287 = vld [vmem:[#allocation8 + $0xa4] sm:$0xf]
    %v288 = vld [vmem:[#allocation8 + $0xa8] sm:$0xff]
    %v289 = vld [vmem:[#allocation8 + $0xb0] sm:$0xf]
    %v290 = vld [vmem:[#allocation8 + $0xb4] sm:$0xff]
    %v291 = vld [vmem:[#allocation8 + $0xbc] sm:$0xf]
    %v292 = vld [vmem:[%s6] sm:$0x7]
    %v294 = vlaneseq
    %v295 = vshrl.u32 %v294, 7
    %v296 = vsub.s32 0, %v295
    %v297 = vrot.slane %v292, %v296
    %v298 = vlaneseq
    %v299 = vshrl.u32 %v298, 7
    %v300 = vsub.s32 1, %v299
    %v301 = vrot.slane %v292, %v300
    %v302 = vlaneseq
    %v303 = vshrl.u32 %v302, 7
    %v304 = vsub.s32 2, %v303
    %v305 = vrot.slane %v292, %v304
    %v311 = vunpack.c.l.b16 %v258
    %v312 = vunpack.c.l.b16 %v259
    %v313 = vpack.c.b16 %v312, %v311
    %v347 = vunpack.c.l.b16 %v260
    %v348 = vunpack.c.h.b16 %v260
    %v349 = vunpack.c.l.b16 %v261
    %v350 = vunpack.c.l.b16 %v262
    %v351 = vunpack.c.h.b16 %v262
    %v352 = vunpack.c.l.b16 %v263
    %v353 = vunpack.c.l.b16 %v264
    %v354 = vunpack.c.h.b16 %v264
    %v355 = vunpack.c.l.b16 %v265
    %v356 = vunpack.c.l.b16 %v266
    %v357 = vunpack.c.h.b16 %v266
    %v358 = vunpack.c.l.b16 %v267
    %v359 = vunpack.c.l.b16 %v268
    %v360 = vunpack.c.h.b16 %v268
    %v361 = vunpack.c.l.b16 %v269
    %v362 = vunpack.c.l.b16 %v270
    %v363 = vunpack.c.h.b16 %v270
    %v364 = vunpack.c.l.b16 %v271
    %v365 = vunpack.c.l.b16 %v272
    %v366 = vunpack.c.h.b16 %v272
    %v367 = vunpack.c.l.b16 %v273
    %v368 = vunpack.c.l.b16 %v274
    %v369 = vunpack.c.h.b16 %v274
    %v370 = vunpack.c.l.b16 %v275
    %v371 = vunpack.c.l.b16 %v276
    %v372 = vunpack.c.h.b16 %v276
    %v373 = vunpack.c.l.b16 %v277
    %v374 = vunpack.c.l.b16 %v278
    %v375 = vunpack.c.h.b16 %v278
    %v376 = vunpack.c.l.b16 %v279
    %v377 = vunpack.c.l.b16 %v280
    %v378 = vunpack.c.h.b16 %v280
    %v379 = vunpack.c.l.b16 %v281
    %v380 = vunpack.c.l.b16 %v282
    %v381 = vunpack.c.h.b16 %v282
    %v382 = vunpack.c.l.b16 %v283
    %v383 = vunpack.c.l.b16 %v284
    %v384 = vunpack.c.h.b16 %v284
    %v385 = vunpack.c.l.b16 %v285
    %v386 = vunpack.c.l.b16 %v286
    %v387 = vunpack.c.h.b16 %v286
    %v388 = vunpack.c.l.b16 %v287
    %v389 = vunpack.c.l.b16 %v288
    %v390 = vunpack.c.h.b16 %v288
    %v391 = vunpack.c.l.b16 %v289
    %v392 = vunpack.c.l.b16 %v290
    %v393 = vunpack.c.h.b16 %v290
    %v394 = vunpack.c.l.b16 %v291
    %v395 = vpack.c.b16 %v350, %v347
    %v396 = vpack.c.b16 %v351, %v348
    %v397 = vpack.c.b16 %v352, %v349
    %v398 = vpack.c.b16 %v356, %v353
    %v399 = vpack.c.b16 %v357, %v354
    %v400 = vpack.c.b16 %v358, %v355
    %v401 = vpack.c.b16 %v362, %v359
    %v402 = vpack.c.b16 %v363, %v360
    %v403 = vpack.c.b16 %v364, %v361
    %v404 = vpack.c.b16 %v368, %v365
    %v405 = vpack.c.b16 %v369, %v366
    %v406 = vpack.c.b16 %v370, %v367
    %v407 = vpack.c.b16 %v374, %v371
    %v408 = vpack.c.b16 %v375, %v372
    %v409 = vpack.c.b16 %v376, %v373
    %v410 = vpack.c.b16 %v380, %v377
    %v411 = vpack.c.b16 %v381, %v378
    %v412 = vpack.c.b16 %v382, %v379
    %v413 = vpack.c.b16 %v386, %v383
    %v414 = vpack.c.b16 %v387, %v384
    %v415 = vpack.c.b16 %v388, %v385
    %v416 = vpack.c.b16 %v392, %v389
    %v417 = vpack.c.b16 %v393, %v390
    %v418 = vpack.c.b16 %v394, %v391
    %443 = vmatprep.subr.bf16.mxu0 %v417
    %444 = vmatpush1.bf16.msra.mxu0 %v416
    %445 = vmatprep.subr.bf16.mxu0 %v414
    %446 = vmatpush1.bf16.msra.mxu0 %v413
    %447 = vmatprep.subr.bf16.mxu0 %v411
    %448 = vmatpush1.bf16.msra.mxu0 %v410
    %449 = vmatprep.subr.bf16.mxu0 %v408
    %450 = vmatpush1.bf16.msra.mxu0 %v407
    %451 = vmatprep.subr.bf16.mxu0 %v405
    %452 = vmatpush1.bf16.msra.mxu0 %v404
    %453 = vmatprep.subr.bf16.mxu0 %v402
    %454 = vmatpush1.bf16.msra.mxu0 %v401
    %455 = vmatprep.subr.bf16.mxu0 %v399
    %456 = vmatpush1.bf16.msra.mxu0 %v398
    %457 = vmatprep.subr.bf16.mxu0 %v396
    %458 = vmatpush1.bf16.msra.mxu0 %v395
    %459 = vmatprep.subr.bf16.mxu0 0
    %460 = vmatpush2.bf16.msra.mxu0 0
    %461 = vmatprep.subr.bf16.mxu0 0
    %462 = vmatpush2.bf16.msra.mxu0 0
    %463 = vmatprep.subr.bf16.mxu0 0
    %464 = vmatpush2.bf16.msra.mxu0 0
    %465 = vmatprep.subr.bf16.mxu0 0
    %466 = vmatpush2.bf16.msra.mxu0 0
    %467 = vmatprep.subr.bf16.mxu0 0
    %468 = vmatpush2.bf16.msra.mxu0 0
    %469 = vmatprep.subr.bf16.mxu0 0
    %470 = vmatpush2.bf16.msra.mxu0 0
    %471 = vmatprep.subr.bf16.mxu0 0
    %472 = vmatpush2.bf16.msra.mxu0 0
    %473 = vmatprep.subr.bf16.mxu0 0
    %474 = vmatpush2.bf16.msra.mxu0 0
    %475 = vmatprep.mubr.bf16.mxu0 0
    %476 = vmatmul.mubr.bf16.gmra.mxu0 %v313
    %v477 = vpop.f32.mrf.mxu0
    %v478 = vadd.f32 %v297, %v477
    %v479 = vpop.f32.mrf.mxu0
    %v480 = vadd.f32 %v301, %v479
    %v481 = vpop.f32.mrf.mxu0
    %v482 = vadd.f32 %v297, %v481
    %v483 = vpop.f32.mrf.mxu0
    %v484 = vadd.f32 %v301, %v483
    %485 = vdwg.mxu0
    %486 = vmatprep.subr.bf16.mxu0 0
    %487 = vmatpush1.bf16.msra.mxu0 %v418
    %488 = vmatprep.subr.bf16.mxu0 0
    %489 = vmatpush1.bf16.msra.mxu0 %v415
    %490 = vmatprep.subr.bf16.mxu0 0
    %491 = vmatpush1.bf16.msra.mxu0 %v412
    %492 = vmatprep.subr.bf16.mxu0 0
    %493 = vmatpush1.bf16.msra.mxu0 %v409
    %494 = vmatprep.subr.bf16.mxu0 0
    %495 = vmatpush1.bf16.msra.mxu0 %v406
    %496 = vmatprep.subr.bf16.mxu0 0
    %497 = vmatpush1.bf16.msra.mxu0 %v403
    %498 = vmatprep.subr.bf16.mxu0 0
    %499 = vmatpush1.bf16.msra.mxu0 %v400
    %500 = vmatprep.subr.bf16.mxu0 0
    %501 = vmatpush1.bf16.msra.mxu0 %v397
    %502 = vmatprep.subr.bf16.mxu0 0
    %503 = vmatpush2.bf16.msra.mxu0 0
    %504 = vmatprep.subr.bf16.mxu0 0
    %505 = vmatpush2.bf16.msra.mxu0 0
    %506 = vmatprep.subr.bf16.mxu0 0
    %507 = vmatpush2.bf16.msra.mxu0 0
    %508 = vmatprep.subr.bf16.mxu0 0
    %509 = vmatpush2.bf16.msra.mxu0 0
    %510 = vmatprep.subr.bf16.mxu0 0
    %511 = vmatpush2.bf16.msra.mxu0 0
    %512 = vmatprep.subr.bf16.mxu0 0
    %513 = vmatpush2.bf16.msra.mxu0 0
    %514 = vmatprep.subr.bf16.mxu0 0
    %515 = vmatpush2.bf16.msra.mxu0 0
    %516 = vmatprep.subr.bf16.mxu0 0
    %517 = vmatpush2.bf16.msra.mxu0 0
    %518 = vmatprep.mubr.bf16.mxu0 0
    %519 = vmatmul.mubr.bf16.gmra.mxu0 %v313
    %v520 = vpop.f32.mrf.mxu0
    %v521 = vadd.f32 %v305, %v520
    %v522 = vpop.f32.mrf.mxu0
    %v523 = vpop.f32.mrf.mxu0
    %v524 = vadd.f32 %v305, %v523
    %v525 = vpop.f32.mrf.mxu0
    %526 = vdwg.mxu0
    %527 = vst [vmem:[#allocation9] sm:$0xff] %v478
    %528 = vst [vmem:[#allocation9 + $0x8] sm:$0xff] %v480
    %529 = vst [vmem:[#allocation9 + $0x10] sm:$0xff] %v521
    %530 = vst [vmem:[#allocation9 + $0x18] sm:$0xff] %v482
    %531 = vst [vmem:[#allocation9 + $0x20] sm:$0xff] %v484
    %532 = vst [vmem:[#allocation9 + $0x28] sm:$0xff] %v524
    // Predicated region
    $region46: #{tpu_custom_call.1} parent=1 // pred_check
      _
    $region47: #{tpu_custom_call.1} parent=1 // pred_check_branch
      %534 = sbr.rel (0) target = $region49
    $region48: #{tpu_custom_call.1} parent=1 // pred_region
      %s536 = ssub.s32 768, 768
      %537 = vsyncadd [#allocation5], %s536
      %s538 = sshll.u32 [#allocation9], 4
      %s539 = int_to_ptr.vmem [resolvable:$true] %s538
      %544 = dma.vmem_to_hbm [thread:$0]  %s539, 768, %s7, [#allocation5], 384, 384, 24
    $region49: #{tpu_custom_call.1} parent=1 // pred_fallthru
      _
    // Predicated region
    $region50: #{tpu_custom_call.1} parent=1 // pred_check
      _
    $region51: #{tpu_custom_call.1} parent=1 // pred_check_branch
      %546 = sbr.rel (0) target = $region53
    $region52: #{tpu_custom_call.1} parent=1 // pred_region
      %547 = dma.done [#allocation5], 768
    $region53: #{tpu_custom_call.1} parent=1 // pred_fallthru
      _
    %548 = vsyncpa [#allocation4], 1
    %549 = vsyncpa [#allocation7], 1
    %550 = vsyncpa [#allocation5], 1

</llo_original>
